<compile_context>
chip_gen: v7x
topology: tpu7x:2x2x1
jax: 0.10.0
libtpu: 0.0.40
codegen_flags: <defaults>
</compile_context>

<pallas_src>
import functools

import jax
import jax.numpy as jnp
from jax.experimental import pallas as pl
from jax.experimental.pallas import tpu as pltpu

EPS = 1e-5
LANE = 128
VMEM_LIMIT = 48 * 1024 * 1024  # headroom under v7x's 64 MiB/TC; >> v5e's 16 MiB default


def _round_up(v, m):
    return (v + m - 1) // m * m


def _pick_tile_rows(H, W, target_px=2048):
    """Rows per h-tile: th | H, th*W a multiple of 128 (lane-dense blocks), th*W near
    target_px (large matmul-N / store tiles for the 256-wide MXUs on v6e/v7x)."""
    cands = [th for th in range(1, H + 1) if H % th == 0 and (th * W) % LANE == 0]
    if not cands:
        return H                      # whole image per tile: block == full extent (legal)
    small = [th for th in cands if th * W <= target_px]
    return max(small) if small else min(cands)


def _conv_tile(x_ref, w_ref, *, w, tw):
    """3x3/s1/p1 conv for one h-tile.

    x_ref: (K_p, (th+2)*W) bf16 -- dx-folded, row-halo'd input tile (K = 3*C_in taps).
    w_ref: (3, C_out_p, K_p) bf16 -- per-dy weights, wT[dy, co, dx*C_in+ci].
    Returns (C_out_p, th*W) f32, pixels lane-dense.
    Three accumulated MXU matmuls (one per dy) over statically shifted lane windows;
    no per-tap relayouts, contraction K = 3*C_in.
    """
    acc = None
    for dy in range(3):
        slab = x_ref[:, dy * w: dy * w + tw]                    # (K_p, th*W) static slice
        part = jnp.dot(w_ref[dy], slab, preferred_element_type=jnp.float32)
        acc = part if acc is None else acc + part
    return acc


def _accumulate_stats(stat_ref, y):
    """Per-image (sum, sum^2) accumulated across the h (arbitrary) grid axis."""
    @pl.when(pl.program_id(1) == 0)
    def _():
        stat_ref[...] = jnp.zeros_like(stat_ref)

    s1 = jnp.sum(y, axis=1, keepdims=True)                      # (C_out_p, 1)
    s2 = jnp.sum(y * y, axis=1, keepdims=True)                  # (C_out_p, 1)
    stat_ref[...] += jnp.concatenate([s1, s2], axis=1)          # (C_out_p, 2)


def _stats_kernel(x_ref, w_ref, stat_ref, *, w, tw):
    """Pass 1 (recompute path): conv tile -> per-image (sum, sum^2) only."""
    y = _conv_tile(x_ref, w_ref, w=w, tw=tw)
    _accumulate_stats(stat_ref, y)


def _stats_store_kernel(x_ref, w_ref, stat_ref, act_ref, *, w, tw):
    """Pass 1 (store path): stats + bf16 un-normalized conv activation (lane-dense)."""
    y = _conv_tile(x_ref, w_ref, w=w, tw=tw)
    _accumulate_stats(stat_ref, y)
    act_ref[...] = y.astype(act_ref.dtype)


def _apply_store_kernel(act_ref, ss_ref, out_ref):
    """Pass 2 (store path): elementwise fused BN affine + ReLU on the stored activation."""
    y = act_ref[...].astype(jnp.float32)
    out_ref[...] = jnp.maximum(y * ss_ref[:, 0:1] + ss_ref[:, 1:2], 0.0).astype(out_ref.dtype)


def _apply_recompute_kernel(x_ref, w_ref, ss_ref, out_ref, *, w, tw):
    """Pass 2 (recompute path): recompute conv tile, fused BN affine + ReLU."""
    y = _conv_tile(x_ref, w_ref, w=w, tw=tw)
    out_ref[...] = jnp.maximum(y * ss_ref[:, 0:1] + ss_ref[:, 1:2], 0.0).astype(out_ref.dtype)


def conv_block_forward(x, conv_w, conv_b, bn_gamma, bn_beta, *, th=None, recompute=None):
    """x: (N, C_in, H, W) f32 NCHW (PyTorch layout). Returns (N, C_out, H, W) f32."""
    del conv_b  # exactly cancelled by training-mode BatchNorm mean subtraction
                # (would have to be reinstated for eval-mode running statistics).
    N, C_in, H, W = x.shape
    C_out, C_in_w, KH, KW = conv_w.shape
    assert (C_in_w, KH, KW) == (C_in, 3, 3)

    K = 3 * C_in                        # dx-folded contraction depth
    K_p = _round_up(K, 8)
    C_out_p = _round_up(C_out, 8)       # sublane padding only; pixels are the lane dim
    if recompute is None:
        # small C_in: K under-fills the MXU -> storing the bf16 activation beats
        # recomputing the conv in pass 2; large C_in: recompute is MXU-bound and cheaper.
        recompute = C_in >= 64
    if th is None:
        th = _pick_tile_rows(H, W)
    assert H % th == 0 and ((th * W) % LANE == 0 or th == H), (th, H, W)
    n_h = H // th
    tw = th * W
    n_px = H * W

    # ---- host-side layout prep (cheap, XLA-fused; no 9x im2col) ----
    # dx-fold: xT[n, dx*C_in+ci, h, w] = xpad[n, ci, h, w+dx]   (3x duplication only)
    xpad = jnp.pad(x, ((0, 0), (0, 0), (1, 1), (1, 1)))
    xT = jnp.stack([xpad[:, :, :, dx:dx + W] for dx in range(3)], axis=1)
    xT = xT.reshape(N, K, H + 2, W)
    # h-tiles with a 2-row halo: every kernel block index is static and nothing is
    # whole-image resident in VMEM (v7x-friendly).
    xblk = jnp.stack([xT[:, :, h * th: h * th + th + 2, :] for h in range(n_h)], axis=1)
    xblk = xblk.reshape(N, n_h, K, (th + 2) * W)
    xblk = jnp.pad(xblk, ((0, 0), (0, 0), (0, K_p - K), (0, 0))).astype(jnp.bfloat16)

    # weights: wT[dy, co, dx*C_in+ci] = conv_w[co, ci, dy, dx]
    wT = jnp.transpose(conv_w, (2, 0, 3, 1)).reshape(3, C_out, K)
    wT = jnp.pad(wT, ((0, 0), (0, C_out_p - C_out), (0, K_p - K))).astype(jnp.bfloat16)

    grid = (N, n_h)
    x_spec = pl.BlockSpec((None, None, K_p, (th + 2) * W), lambda n, h: (n, h, 0, 0))
    # weights never change across the grid; TODO(synk): pipeline_mode=pl.Buffered(1)
    # would drop their second (double-buffer) VMEM copy.
    w_spec = pl.BlockSpec((3, C_out_p, K_p), lambda n, h: (0, 0, 0))
    stat_spec = pl.BlockSpec((None, C_out_p, 2), lambda n, h: (n, 0, 0))
    tile_spec = pl.BlockSpec((None, C_out_p, tw), lambda n, h: (n, 0, h))
    ss_spec = pl.BlockSpec((C_out_p, 2), lambda n, h: (0, 0))

    # h carries the per-image stats accumulation in pass 1 -> "arbitrary"; n stays
    # "parallel" (keep N*n_h >= 2 balanced chunks so both v7x TensorCores get work).
    cparams1 = pltpu.CompilerParams(dimension_semantics=("parallel", "arbitrary"),
                                    vmem_limit_bytes=VMEM_LIMIT)
    cparams2 = pltpu.CompilerParams(dimension_semantics=("parallel", "parallel"),
                                    vmem_limit_bytes=VMEM_LIMIT)

    conv_flops = 2 * N * n_px * C_out_p * 3 * K_p
    x_bytes = xblk.size * 2
    w_bytes = wT.size * 2
    act_bytes = N * C_out_p * n_px * 2
    out_bytes = N * C_out_p * n_px * 4
    stat_bytes = N * C_out_p * 2 * 4

    stats_sds = jax.ShapeDtypeStruct((N, C_out_p, 2), jnp.float32)
    kern_kw = dict(w=W, tw=tw)

    # ---- pass 1: conv (+ optional bf16 activation) and per-image (sum, sum^2) ----
    if recompute:
        stats = pl.pallas_call(
            functools.partial(_stats_kernel, **kern_kw),
            grid=grid,
            in_specs=[x_spec, w_spec],
            out_specs=stat_spec,
            out_shape=stats_sds,
            compiler_params=cparams1,
            cost_estimate=pl.CostEstimate(
                flops=conv_flops + 3 * N * n_px * C_out_p, transcendentals=0,
                bytes_accessed=x_bytes + w_bytes + stat_bytes),
        )(xblk, wT)
        act = None
    else:
        stats, act = pl.pallas_call(
            functools.partial(_stats_store_kernel, **kern_kw),
            grid=grid,
            in_specs=[x_spec, w_spec],
            out_specs=(stat_spec, tile_spec),
            out_shape=(stats_sds,
                       jax.ShapeDtypeStruct((N, C_out_p, n_px), jnp.bfloat16)),
            compiler_params=cparams1,
            cost_estimate=pl.CostEstimate(
                flops=conv_flops + 3 * N * n_px * C_out_p, transcendentals=0,
                bytes_accessed=x_bytes + w_bytes + stat_bytes + act_bytes),
        )(xblk, wT)

    # ---- tiny per-channel BN math (training-mode, biased variance) in the wrapper ----
    m_total = N * n_px
    sums = jnp.sum(stats, axis=0)                       # (C_out_p, 2)
    mean = sums[:, 0] / m_total
    # NOTE: E[y^2]-E[y]^2 can cancel when |mean| >> std; acceptable here since the conv
    # output is bias-free.  TODO(synk): Welford-style (count, mean, M2) merge if needed.
    var = jnp.maximum(sums[:, 1] / m_total - mean * mean, 0.0)
    inv = jax.lax.rsqrt(var + EPS)
    gamma_p = jnp.pad(bn_gamma.astype(jnp.float32), (0, C_out_p - C_out))  # zero-padded:
    beta_p = jnp.pad(bn_beta.astype(jnp.float32), (0, C_out_p - C_out))    # keeps pad rows 0
    scale = gamma_p * inv
    shift = beta_p - mean * scale
    scale_shift = jnp.stack([scale, shift], axis=1)     # (C_out_p, 2)

    out_sds = jax.ShapeDtypeStruct((N, C_out_p, n_px), jnp.float32)

    # ---- pass 2: fused BN affine + ReLU (elementwise on stored act, or conv recompute) --
    if recompute:
        out_flat = pl.pallas_call(
            functools.partial(_apply_recompute_kernel, **kern_kw),
            grid=grid,
            in_specs=[x_spec, w_spec, ss_spec],
            out_specs=tile_spec,
            out_shape=out_sds,
            compiler_params=cparams2,
            cost_estimate=pl.CostEstimate(
                flops=conv_flops + 3 * N * n_px * C_out_p, transcendentals=0,
                bytes_accessed=x_bytes + w_bytes + out_bytes),
        )(xblk, wT, scale_shift)
    else:
        out_flat = pl.pallas_call(
            _apply_store_kernel,
            grid=grid,
            in_specs=[tile_spec, ss_spec],
            out_specs=tile_spec,
            out_shape=out_sds,
            compiler_params=cparams2,
            cost_estimate=pl.CostEstimate(
                flops=3 * N * n_px * C_out_p, transcendentals=0,
                bytes_accessed=act_bytes + out_bytes),
        )(act, scale_shift)

    # pixels are already NCHW-ordered: just reshape (and drop sublane channel padding).
    out = out_flat.reshape(N, C_out_p, H, W)
    if C_out_p != C_out:
        out = out[:, :C_out]
    return out


def _reference(x, conv_w, conv_b, bn_gamma, bn_beta):
    """Pure-JAX reference matching PyTorch Conv2d + BatchNorm2d(train) + ReLU."""
    y = jax.lax.conv_general_dilated(
        x, conv_w, window_strides=(1, 1), padding=((1, 1), (1, 1)),
        dimension_numbers=("NCHW", "OIHW", "NCHW"))
    y = y + conv_b[None, :, None, None]
    mean = jnp.mean(y, axis=(0, 2, 3), keepdims=True)
    var = jnp.mean((y - mean) ** 2, axis=(0, 2, 3), keepdims=True)
    y = (y - mean) * jax.lax.rsqrt(var + EPS)
    y = y * bn_gamma[None, :, None, None] + bn_beta[None, :, None, None]
    return jnp.maximum(y, 0.0)


if __name__ == "__main__":
    key = jax.random.PRNGKey(0)
    k_x, k_w, k_b = jax.random.split(key, 3)

    N, C_in, H, W = 2, 4, 16, 16
    C_out = 8

    x = jax.random.normal(k_x, (N, C_in, H, W), dtype=jnp.float32)

    # deterministic synthetic parameters (not a checkpoint)
    fan_in = C_in * 3 * 3
    conv_w = jax.random.normal(k_w, (C_out, C_in, 3, 3), dtype=jnp.float32) / jnp.sqrt(fan_in)
    conv_b = jax.random.normal(k_b, (C_out,), dtype=jnp.float32) * 0.1
    bn_gamma = jnp.ones((C_out,), dtype=jnp.float32)   # BatchNorm2d default init
    bn_beta = jnp.zeros((C_out,), dtype=jnp.float32)

    ref = _reference(x, conv_w, conv_b, bn_gamma, bn_beta)

    # bf16 matmul operands (f32 accumulate) -> ~1e-3 elementwise noise vs the pure-f32
    # reference; 2e-2 still catches any indexing / statistics bug.
    configs = [
        dict(th=8, recompute=False),   # h-tiling + stats accumulation + store path
        dict(th=8, recompute=True),    # h-tiling + recompute path
        dict(),                        # auto tile / auto path (single h-tile here)
    ]
    for cfg in configs:
        fwd = jax.jit(functools.partial(conv_block_forward, **cfg))
        out = jax.block_until_ready(fwd(x, conv_w, conv_b, bn_gamma, bn_beta))
        assert out.shape == (N, C_out, H, W), (out.shape, cfg)
        assert jnp.allclose(out, ref, atol=2e-2, rtol=2e-2), f"mismatch for {cfg}"

    print("KERNEL_OK")
</pallas_src>

<mosaic_0001>
module attributes {stable_mosaic.version = 11 : i64} {
  func.func @_stats_store_kernel(%arg0: i32, %arg1: i32, %arg2: memref<1x1x16x160xbf16, #tpu.memory_space<vmem>>, %arg3: memref<3x8x16xbf16, #tpu.memory_space<vmem>>, %arg4: memref<1x8x2xf32, #tpu.memory_space<vmem>>, %arg5: memref<1x8x128xbf16, #tpu.memory_space<vmem>>) attributes {dimension_semantics = [#tpu.dimension_semantics<parallel>, #tpu.dimension_semantics<arbitrary>], iteration_bounds = array<i64: 2, 2>, scalar_prefetch = 0 : i64, scratch_operands = 0 : i64, tpu.core_type = #tpu.core_type<tc>, window_params = [{transform_indices = @transform_0, window_bounds = array<i64: 1, 1, 16, 160>}, {pipeline_mode = #tpu.pipeline_mode<synchronous>, transform_indices = @transform_1, window_bounds = array<i64: 3, 8, 16>}, {transform_indices = @transform_2, window_bounds = array<i64: 1, 8, 2>}, {transform_indices = @transform_3, window_bounds = array<i64: 1, 8, 128>}]} {
    %c0 = arith.constant 0 : index
    %c0_0 = arith.constant 0 : index
    %c0_1 = arith.constant 0 : index
    %c0_2 = arith.constant 0 : index
    %0 = vector.load %arg2[%c0, %c0_0, %c0_1, %c0_2] : memref<1x1x16x160xbf16, #tpu.memory_space<vmem>>, vector<1x1x16x128xbf16>
    %1 = vector.shape_cast %0 : vector<1x1x16x128xbf16> to vector<16x128xbf16>
    %c0_3 = arith.constant 0 : index
    %c0_4 = arith.constant 0 : index
    %c0_5 = arith.constant 0 : index
    %2 = vector.load %arg3[%c0_3, %c0_4, %c0_5] : memref<3x8x16xbf16, #tpu.memory_space<vmem>>, vector<1x8x16xbf16>
    %3 = vector.shape_cast %2 : vector<1x8x16xbf16> to vector<8x16xbf16>
    %cst = arith.constant dense<0.000000e+00> : vector<8x128xf32>
    %4 = tpu.matmul %3, %1, %cst {dimension_numbers = #tpu.dot_dimension_numbers<[1], [0], [0], [1], [0, 0, 1, 1], [], []>} : vector<8x16xbf16>, vector<16x128xbf16>, vector<8x128xf32> -> vector<8x128xf32>
    %c0_6 = arith.constant 0 : index
    %c0_7 = arith.constant 0 : index
    %c0_8 = arith.constant 0 : index
    %c16 = arith.constant 16 : index
    %5 = vector.load %arg2[%c0_6, %c0_7, %c0_8, %c16] : memref<1x1x16x160xbf16, #tpu.memory_space<vmem>>, vector<1x1x16x128xbf16>
    %6 = vector.shape_cast %5 : vector<1x1x16x128xbf16> to vector<16x128xbf16>
    %c1 = arith.constant 1 : index
    %c0_9 = arith.constant 0 : index
    %c0_10 = arith.constant 0 : index
    %7 = vector.load %arg3[%c1, %c0_9, %c0_10] : memref<3x8x16xbf16, #tpu.memory_space<vmem>>, vector<1x8x16xbf16>
    %8 = vector.shape_cast %7 : vector<1x8x16xbf16> to vector<8x16xbf16>
    %cst_11 = arith.constant dense<0.000000e+00> : vector<8x128xf32>
    %9 = tpu.matmul %8, %6, %cst_11 {dimension_numbers = #tpu.dot_dimension_numbers<[1], [0], [0], [1], [0, 0, 1, 1], [], []>} : vector<8x16xbf16>, vector<16x128xbf16>, vector<8x128xf32> -> vector<8x128xf32>
    %10 = arith.addf %4, %9 : vector<8x128xf32>
    %c0_12 = arith.constant 0 : index
    %c0_13 = arith.constant 0 : index
    %c0_14 = arith.constant 0 : index
    %c32 = arith.constant 32 : index
    %11 = vector.load %arg2[%c0_12, %c0_13, %c0_14, %c32] : memref<1x1x16x160xbf16, #tpu.memory_space<vmem>>, vector<1x1x16x128xbf16>
    %12 = vector.shape_cast %11 : vector<1x1x16x128xbf16> to vector<16x128xbf16>
    %c2 = arith.constant 2 : index
    %c0_15 = arith.constant 0 : index
    %c0_16 = arith.constant 0 : index
    %13 = vector.load %arg3[%c2, %c0_15, %c0_16] : memref<3x8x16xbf16, #tpu.memory_space<vmem>>, vector<1x8x16xbf16>
    %14 = vector.shape_cast %13 : vector<1x8x16xbf16> to vector<8x16xbf16>
    %cst_17 = arith.constant dense<0.000000e+00> : vector<8x128xf32>
    %15 = tpu.matmul %14, %12, %cst_17 {dimension_numbers = #tpu.dot_dimension_numbers<[1], [0], [0], [1], [0, 0, 1, 1], [], []>} : vector<8x16xbf16>, vector<16x128xbf16>, vector<8x128xf32> -> vector<8x128xf32>
    %16 = arith.addf %10, %15 : vector<8x128xf32>
    %c0_i32 = arith.constant 0 : i32
    %17 = arith.cmpi eq, %arg1, %c0_i32 : i32
    %18 = arith.extui %17 : i1 to i32
    %c0_i32_18 = arith.constant 0 : i32
    %19 = arith.cmpi ne, %18, %c0_i32_18 : i32
    scf.if %19 {
      %cst_30 = arith.constant 0.000000e+00 : f32
      %36 = vector.broadcast %cst_30 : f32 to vector<8x2xf32>
      %c0_31 = arith.constant 0 : index
      %c0_32 = arith.constant 0 : index
      %c0_33 = arith.constant 0 : index
      %37 = vector.load %arg4[%c0_31, %c0_32, %c0_33] : memref<1x8x2xf32, #tpu.memory_space<vmem>>, vector<1x8x2xf32>
      %38 = vector.shape_cast %37 : vector<1x8x2xf32> to vector<8x2xf32>
      %39 = vector.shape_cast %36 : vector<8x2xf32> to vector<1x8x2xf32>
      tpu.vector_store %arg4[%c0_31, %c0_32, %c0_33], %39 {strides = array<i32>} : memref<1x8x2xf32, #tpu.memory_space<vmem>>, vector<1x8x2xf32>,
    } else {
    }
    %cst_19 = arith.constant dense<0.000000e+00> : vector<8xf32>
    %20 = vector.multi_reduction <add>, %16, %cst_19 [1] : vector<8x128xf32> to vector<8xf32>
    %21 = vector.shape_cast %20 : vector<8xf32> to vector<8x1xf32>
    %22 = arith.mulf %16, %16 : vector<8x128xf32>
    %cst_20 = arith.constant dense<0.000000e+00> : vector<8xf32>
    %23 = vector.multi_reduction <add>, %22, %cst_20 [1] : vector<8x128xf32> to vector<8xf32>
    %24 = vector.shape_cast %23 : vector<8xf32> to vector<8x1xf32>
    %c0_21 = arith.constant 0 : index
    %c0_22 = arith.constant 0 : index
    %c0_23 = arith.constant 0 : index
    %25 = vector.load %arg4[%c0_21, %c0_22, %c0_23] : memref<1x8x2xf32, #tpu.memory_space<vmem>>, vector<1x8x2xf32>
    %26 = vector.shape_cast %25 : vector<1x8x2xf32> to vector<8x2xf32>
    %27 = tpu.concatenate %21, %24 in 1 : vector<8x1xf32>, vector<8x1xf32> -> vector<8x2xf32>
    %28 = arith.addf %26, %27 : vector<8x2xf32>
    %c0_24 = arith.constant 0 : index
    %c0_25 = arith.constant 0 : index
    %c0_26 = arith.constant 0 : index
    %29 = vector.load %arg4[%c0_24, %c0_25, %c0_26] : memref<1x8x2xf32, #tpu.memory_space<vmem>>, vector<1x8x2xf32>
    %30 = vector.shape_cast %29 : vector<1x8x2xf32> to vector<8x2xf32>
    %31 = vector.shape_cast %28 : vector<8x2xf32> to vector<1x8x2xf32>
    tpu.vector_store %arg4[%c0_24, %c0_25, %c0_26], %31 {strides = array<i32>} : memref<1x8x2xf32, #tpu.memory_space<vmem>>, vector<1x8x2xf32>,
    %32 = arith.truncf %16 : vector<8x128xf32> to vector<8x128xbf16>
    %c0_27 = arith.constant 0 : index
    %c0_28 = arith.constant 0 : index
    %c0_29 = arith.constant 0 : index
    %33 = vector.load %arg5[%c0_27, %c0_28, %c0_29] : memref<1x8x128xbf16, #tpu.memory_space<vmem>>, vector<1x8x128xbf16>
    %34 = vector.shape_cast %33 : vector<1x8x128xbf16> to vector<8x128xbf16>
    %35 = vector.shape_cast %32 : vector<8x128xbf16> to vector<1x8x128xbf16>
    tpu.vector_store %arg5[%c0_27, %c0_28, %c0_29], %35 {strides = array<i32>} : memref<1x8x128xbf16, #tpu.memory_space<vmem>>, vector<1x8x128xbf16>,
    return
  }
  func.func @transform_0(%arg0: i32, %arg1: i32) -> (i32, i32, i32, i32) {
    %c0_i32 = arith.constant 0 : i32
    %c0_i32_0 = arith.constant 0 : i32
    %c0_i32_1 = arith.constant 0 : i32
    return %arg0, %arg1, %c0_i32, %c0_i32_0 : i32, i32, i32, i32
  }
  func.func @transform_1(%arg0: i32, %arg1: i32) -> (i32, i32, i32) {
    %c0_i32 = arith.constant 0 : i32
    %c0_i32_0 = arith.constant 0 : i32
    %c0_i32_1 = arith.constant 0 : i32
    %c0_i32_2 = arith.constant 0 : i32
    return %c0_i32, %c0_i32_0, %c0_i32_1 : i32, i32, i32
  }
  func.func @transform_2(%arg0: i32, %arg1: i32) -> (i32, i32, i32) {
    %c0_i32 = arith.constant 0 : i32
    %c0_i32_0 = arith.constant 0 : i32
    %c0_i32_1 = arith.constant 0 : i32
    return %arg0, %c0_i32, %c0_i32_0 : i32, i32, i32
  }
  func.func @transform_3(%arg0: i32, %arg1: i32) -> (i32, i32, i32) {
    %c0_i32 = arith.constant 0 : i32
    %c0_i32_0 = arith.constant 0 : i32
    return %arg0, %c0_i32, %arg1 : i32, i32, i32
  }
}

module attributes {stable_mosaic.version = 11 : i64} {
  func.func @_apply_store_kernel(%arg0: i32, %arg1: i32, %arg2: memref<1x8x128xbf16, #tpu.memory_space<vmem>>, %arg3: memref<8x2xf32, #tpu.memory_space<vmem>>, %arg4: memref<1x8x128xf32, #tpu.memory_space<vmem>>) attributes {dimension_semantics = [#tpu.dimension_semantics<parallel>, #tpu.dimension_semantics<parallel>], iteration_bounds = array<i64: 2, 2>, scalar_prefetch = 0 : i64, scratch_operands = 0 : i64, tpu.core_type = #tpu.core_type<tc>, window_params = [{transform_indices = @transform_0, window_bounds = array<i64: 1, 8, 128>}, {pipeline_mode = #tpu.pipeline_mode<synchronous>, transform_indices = @transform_1, window_bounds = array<i64: 8, 2>}, {transform_indices = @transform_2, window_bounds = array<i64: 1, 8, 128>}]} {
    %c0 = arith.constant 0 : index
    %c0_0 = arith.constant 0 : index
    %c0_1 = arith.constant 0 : index
    %0 = vector.load %arg2[%c0, %c0_0, %c0_1] : memref<1x8x128xbf16, #tpu.memory_space<vmem>>, vector<1x8x128xbf16>
    %1 = vector.shape_cast %0 : vector<1x8x128xbf16> to vector<8x128xbf16>
    %2 = arith.extf %1 : vector<8x128xbf16> to vector<8x128xf32>
    %c0_2 = arith.constant 0 : index
    %c0_3 = arith.constant 0 : index
    %3 = vector.load %arg3[%c0_2, %c0_3] : memref<8x2xf32, #tpu.memory_space<vmem>>, vector<8x1xf32>
    %4 = vector.broadcast %3 : vector<8x1xf32> to vector<8x128xf32>
    %5 = arith.mulf %2, %4 : vector<8x128xf32>
    %c0_4 = arith.constant 0 : index
    %c1 = arith.constant 1 : index
    %6 = vector.load %arg3[%c0_4, %c1] : memref<8x2xf32, #tpu.memory_space<vmem>>, vector<8x1xf32>
    %7 = vector.broadcast %6 : vector<8x1xf32> to vector<8x128xf32>
    %8 = arith.addf %5, %7 : vector<8x128xf32>
    %cst = arith.constant 0.000000e+00 : f32
    %9 = vector.broadcast %cst : f32 to vector<8x128xf32>
    %10 = arith.maximumf %8, %9 : vector<8x128xf32>
    %c0_5 = arith.constant 0 : index
    %c0_6 = arith.constant 0 : index
    %c0_7 = arith.constant 0 : index
    %11 = vector.load %arg4[%c0_5, %c0_6, %c0_7] : memref<1x8x128xf32, #tpu.memory_space<vmem>>, vector<1x8x128xf32>
    %12 = vector.shape_cast %11 : vector<1x8x128xf32> to vector<8x128xf32>
    %13 = vector.shape_cast %10 : vector<8x128xf32> to vector<1x8x128xf32>
    tpu.vector_store %arg4[%c0_5, %c0_6, %c0_7], %13 {strides = array<i32>} : memref<1x8x128xf32, #tpu.memory_space<vmem>>, vector<1x8x128xf32>,
    return
  }
  func.func @transform_0(%arg0: i32, %arg1: i32) -> (i32, i32, i32) {
    %c0_i32 = arith.constant 0 : i32
    %c0_i32_0 = arith.constant 0 : i32
    return %arg0, %c0_i32, %arg1 : i32, i32, i32
  }
  func.func @transform_1(%arg0: i32, %arg1: i32) -> (i32, i32) {
    %c0_i32 = arith.constant 0 : i32
    %c0_i32_0 = arith.constant 0 : i32
    %c0_i32_1 = arith.constant 0 : i32
    return %c0_i32, %c0_i32_0 : i32, i32
  }
  func.func @transform_2(%arg0: i32, %arg1: i32) -> (i32, i32, i32) {
    %c0_i32 = arith.constant 0 : i32
    %c0_i32_0 = arith.constant 0 : i32
    return %arg0, %c0_i32, %arg1 : i32, i32, i32
  }
}

</mosaic_0001>

<llo_original>
// kernel: conv_block_forward.3
$region0: #{conv_block_forward.3}
  #allocation0 [shape = 'u32[]', space=smem, size = 0x4, offset = 0x4, fixed_abs, tag = 'smem constant byte address 0x4 - core index']
  #allocation1 [shape = 'u32[144,128]{1,0:T(1,128)}', space=vmem, size = 0x12000, scoped, tag = 'internal scratch']
  %s0 = inlined_call_operand.vmem [shape: bf16[2,8,256], index: 0, kind: input, shape index: {}]
  %s1 = inlined_call_operand.vmem [shape: f32[8,2], index: 1, kind: input, shape index: {}]
  %s2 = inlined_call_operand.vmem [shape: f32[2,8,256], index: 2, kind: output, shape index: {}]
  %s3 = sld [smem:[#allocation0]]
  $region41: #{conv_block_forward.3} parent=0
    _
  %s5 = ssub.s32 1, %s3
  %s6 = scalar_select 0, %s5, %s3
  loop: start=0, step=1, limit=6
  $region2: #{conv_block_forward.3} parent=0 // loop_pre_header
    _
  $region3: #{conv_block_forward.3} parent=0 // loop_header
    %s8 = sphi 0, %s12
    %p9 = scmp.ge.s32.totalorder %s8, 6
    %s15 = sphi 0, %s27
    %s16 = sphi 0, %s23
    %s17 = sphi 0, %s15
    %s18 = sphi 0, %s16
    %s19 = sphi 0, %s17
    %s20 = sphi 0, %s18
    %s32 = sphi 0, %s34
    %s35 = sphi 0, %s32
    %s36 = sphi 0, %s35
    %s52 = sphi 0, %s36
    %s56 = sphi 0, %s56
    %s58 = sphi 0, %s56
    %s59 = sphi 0, %s58
    %s73 = sphi 0, %s59
    %s81 = sphi 0, %s83
    %s84 = sphi 0, %s81
    %s85 = sphi 0, %s84
    %s101 = sphi 0, %s85
  $region4: #{conv_block_forward.3} parent=0 // loop_header_branch
    %11 = sbr.rel (%p9) target = $region8
  $region5: #{conv_block_forward.3} parent=0 // loop_body
    %s13 = ssub.s32 %s8, 1
    %s14 = ssub.s32 %s8, 2
    %s21 = sadd.s32 1, %s16
    %p22 = scmp.ge.s32.totalorder %s21, 2
    %s23 = scalar_select %p22, 0, %s21
    %s24 = sadd.s32 1, %s15
    %s25 = scalar_select %p22, %s24, %s15
    %p26 = scmp.ge.s32.totalorder %s25, 2
    %s27 = scalar_select %p26, 0, %s25
    %s28 = ssub.s32 %s15, %s27
    %s29 = ssub.s32 %s16, %s23
    %s30 = sor.u32 %s28, %s29
    %p31 = scmp.eq.s32.totalorder %s30, 0
    %s33 = sadd.s32 %s32, 1
    %s34 = scalar_select %p31, %s32, %s33
    %p37 = pneg %p31
    %p38 = scmp.eq.s32.totalorder %s8, 3
    %p39 = por %p37, %p38
    %p40 = scmp.ne.s32.totalorder %s32, %s35
    %p41 = scmp.eq.s32.totalorder %s8, 0
    %p42 = por %p40, %p41
    %p43 = scmp.ne.s32.totalorder %s32, %s35
    %p44 = scmp.eq.s32.totalorder %s13, 3
    %p45 = por %p43, %p44
    %p46 = scmp.ne.s32.totalorder %s35, %s36
    %p47 = scmp.eq.s32.totalorder %s13, 0
    %p48 = por %p46, %p47
    %p49 = scmp.ne.s32.totalorder %s35, %s36
    %p50 = scmp.eq.s32.totalorder %s14, 3
    %p51 = por %p49, %p50
    %p53 = scmp.ne.s32.totalorder %s36, %s52
    %p54 = scmp.eq.s32.totalorder %s14, 0
    %p55 = por %p53, %p54
    %s57 = sadd.s32 %s56, 1
    %p60 = scmp.eq.s32.totalorder %s8, 3
    %p61 = scmp.ne.s32.totalorder %s56, %s58
    %p62 = scmp.eq.s32.totalorder %s8, 0
    %p63 = por %p61, %p62
    %p64 = scmp.ne.s32.totalorder %s56, %s58
    %p65 = scmp.eq.s32.totalorder %s13, 3
    %p66 = por %p64, %p65
    %p67 = scmp.ne.s32.totalorder %s58, %s59
    %p68 = scmp.eq.s32.totalorder %s13, 0
    %p69 = por %p67, %p68
    %p70 = scmp.ne.s32.totalorder %s58, %s59
    %p71 = scmp.eq.s32.totalorder %s14, 3
    %p72 = por %p70, %p71
    %p74 = scmp.ne.s32.totalorder %s59, %s73
    %p75 = scmp.eq.s32.totalorder %s14, 0
    %p76 = por %p74, %p75
    %s77 = ssub.s32 %s15, %s27
    %s78 = ssub.s32 %s16, %s23
    %s79 = sor.u32 %s77, %s78
    %p80 = scmp.eq.s32.totalorder %s79, 0
    %s82 = sadd.s32 %s81, 1
    %s83 = scalar_select %p80, %s81, %s82
    %p86 = pneg %p80
    %p87 = scmp.eq.s32.totalorder %s8, 3
    %p88 = por %p86, %p87
    %p89 = scmp.ne.s32.totalorder %s81, %s84
    %p90 = scmp.eq.s32.totalorder %s8, 0
    %p91 = por %p89, %p90
    %p92 = scmp.ne.s32.totalorder %s81, %s84
    %p93 = scmp.eq.s32.totalorder %s13, 3
    %p94 = por %p92, %p93
    %p95 = scmp.ne.s32.totalorder %s84, %s85
    %p96 = scmp.eq.s32.totalorder %s13, 0
    %p97 = por %p95, %p96
    %p98 = scmp.ne.s32.totalorder %s84, %s85
    %p99 = scmp.eq.s32.totalorder %s14, 3
    %p100 = por %p98, %p99
    %p102 = scmp.ne.s32.totalorder %s85, %s101
    %p103 = scmp.eq.s32.totalorder %s14, 0
    %p104 = por %p102, %p103
    %p105 = scmp.le.s32.totalorder 1, %s8
    %p106 = scmp.lt.s32.totalorder %s8, 5
    %p107 = pnand %p105, %p106
    %p108 = pneg %p107
    // Predicated region
    $region9: #{conv_block_forward.3} parent=5 // pred_check
      _
    $region10: #{conv_block_forward.3} parent=5 // pred_check_branch
      %110 = sbr.rel (%p107) target = $region12
    $region11: #{conv_block_forward.3} parent=5 // pred_region
      %s111 = ssub.s32 %s8, 1
      // Predicated region
      $region13: #{conv_block_forward.3} parent=11 // pred_check
        %p112 = pneg %p69
      $region14: #{conv_block_forward.3} parent=11 // pred_check_branch
        %114 = sbr.rel (%p112) target = $region16
      $region15: #{conv_block_forward.3} parent=11 // pred_region
        _
      $region16: #{conv_block_forward.3} parent=11 // pred_fallthru
        _
    $region12: #{conv_block_forward.3} parent=5 // pred_fallthru
      _
    %p115 = scmp.lt.s32.totalorder %s8, 4
    // Predicated region
    $region17: #{conv_block_forward.3} parent=5 // pred_check
      %p116 = pneg %p115
    $region18: #{conv_block_forward.3} parent=5 // pred_check_branch
      %118 = sbr.rel (%p116) target = $region20
    $region19: #{conv_block_forward.3} parent=5 // pred_region
      // Predicated region
      $region21: #{conv_block_forward.3} parent=19 // pred_check
        %p119 = pneg %p42
      $region22: #{conv_block_forward.3} parent=19 // pred_check_branch
        %121 = sbr.rel (%p119) target = $region24
      $region23: #{conv_block_forward.3} parent=19 // pred_region
        %p122 = scmp.lt.s32.totalorder %s15, 1
        %s123 = scalar_select %p122, %s15, 1
        %p124 = scmp.lt.s32.totalorder %s16, 1
        %s125 = scalar_select %p124, %s16, 1
        %s126 = smul.addr %s123, 2
        %s127 = sadd.s32 %s125, %s126
        %s128 = smul.addr %s127, 4
        %s129 = scalar_lea.vmem %s0, %s128
      $region24: #{conv_block_forward.3} parent=19 // pred_fallthru
        _
    $region20: #{conv_block_forward.3} parent=5 // pred_fallthru
      _
    %p130 = scmp.le.s32.totalorder 1, %s8
    %p131 = scmp.lt.s32.totalorder %s8, 5
    %p132 = pnand %p130, %p131
    %p133 = pneg %p132
    // Predicated region
    $region25: #{conv_block_forward.3} parent=5 // pred_check
      _
    $region26: #{conv_block_forward.3} parent=5 // pred_check_branch
      %135 = sbr.rel (%p132) target = $region28
    $region27: #{conv_block_forward.3} parent=5 // pred_region
      %s136 = ssub.s32 %s8, 1
      %p137 = scmp.lt.s32.totalorder %s17, 1
      %s138 = scalar_select %p137, %s17, 1
      %p139 = scmp.lt.s32.totalorder %s18, 1
      %s140 = scalar_select %p139, %s18, 1
      %s141 = smul.addr %s138, 2
      %s142 = sadd.s32 %s140, %s141
      %s143 = smul.addr %s142, 4
      %s144 = scalar_lea.vmem %s0, %s143
      %p145 = pneg %p48
      %p146 = pneg %p45
      %p147 = pneg %p69
      %p148 = pneg %p66
      %p149 = pneg %p97
      %p150 = pneg %p94
      %p151 = scmp.lt.s32.totalorder %s17, 1
      %s152 = scalar_select %p151, %s17, 1
      %p153 = scmp.lt.s32.totalorder %s18, 1
      %s154 = scalar_select %p153, %s18, 1
      %s155 = smul.addr %s152, 2
      %s156 = sadd.s32 %s154, %s155
      %s157 = smul.addr %s156, 8
      %s158 = scalar_lea.vmem %s2, %s157
      %p159 = scmp.lt.s32.totalorder %s17, 1
      %s160 = scalar_select %p159, %s17, 1
      %p161 = scmp.lt.s32.totalorder %s18, 1
      %s162 = scalar_select %p161, %s18, 1
      %s163 = smul.addr %s160, 2
      %s164 = sadd.s32 %s162, %s163
      %s165 = smul.addr %s164, 4
      %s166 = scalar_lea.vmem %s0, %s165
      %p167 = scmp.lt.s32.totalorder %s17, 1
      %s168 = scalar_select %p167, %s17, 1
      %p169 = scmp.lt.s32.totalorder %s18, 1
      %s170 = scalar_select %p169, %s18, 1
      %s171 = smul.addr %s168, 2
      %s172 = sadd.s32 %s170, %s171
      %s173 = smul.addr %s172, 8
      %s174 = scalar_lea.vmem %s2, %s173
      %v175 = vld [vmem:[%s166] sm:$0xf]
      %v176 = vunpack.c.l.bf16 %v175
      %v177 = vld [vmem:[%s1] sm:$0xff]
      %179 = vset.pattern.permute.xlu0 0
      %180 = vperm.xlu0 %179, %v177
      %v181 = vpop.permute.xlu0 %180
      %v183 = vmul.f32 %v176, %v181
      %184 = vset.pattern.permute.xlu0 1
      %185 = vperm.xlu0 %184, %v177
      %v186 = vpop.permute.xlu0 %185
      %v188 = vadd.f32 %v183, %v186
      %v189 = vmax.f32 %v188, 0.0
      %190 = vst [vmem:[%s174] sm:$0xff] %v189
      %p191 = scmp.lt.s32.totalorder %s17, 1
      %s192 = scalar_select %p191, %s17, 1
      %p193 = scmp.lt.s32.totalorder %s18, 1
      %s194 = scalar_select %p193, %s18, 1
      %s195 = smul.addr %s192, 2
      %s196 = sadd.s32 %s194, %s195
      %s197 = smul.addr %s196, 8
      %s198 = scalar_lea.vmem %s2, %s197
      // Predicated region
      $region29: #{conv_block_forward.3} parent=27 // pred_check
        %p199 = pneg %p94
      $region30: #{conv_block_forward.3} parent=27 // pred_check_branch
        %201 = sbr.rel (%p199) target = $region32
      $region31: #{conv_block_forward.3} parent=27 // pred_region
        _
      $region32: #{conv_block_forward.3} parent=27 // pred_fallthru
        _
    $region28: #{conv_block_forward.3} parent=5 // pred_fallthru
      _
    %p202 = scmp.le.s32.totalorder 2, %s8
    // Predicated region
    $region33: #{conv_block_forward.3} parent=5 // pred_check
      %p203 = pneg %p202
    $region34: #{conv_block_forward.3} parent=5 // pred_check_branch
      %205 = sbr.rel (%p203) target = $region36
    $region35: #{conv_block_forward.3} parent=5 // pred_region
      %s206 = ssub.s32 %s8, 2
      // Predicated region
      $region37: #{conv_block_forward.3} parent=35 // pred_check
        %p207 = pneg %p100
      $region38: #{conv_block_forward.3} parent=35 // pred_check_branch
        %209 = sbr.rel (%p207) target = $region40
      $region39: #{conv_block_forward.3} parent=35 // pred_region
        %p210 = scmp.lt.s32.totalorder %s19, 1
        %s211 = scalar_select %p210, %s19, 1
        %p212 = scmp.lt.s32.totalorder %s20, 1
        %s213 = scalar_select %p212, %s20, 1
        %s214 = smul.addr %s211, 2
        %s215 = sadd.s32 %s213, %s214
        %s216 = smul.addr %s215, 8
        %s217 = scalar_lea.vmem %s2, %s216
      $region40: #{conv_block_forward.3} parent=35 // pred_fallthru
        _
    $region36: #{conv_block_forward.3} parent=5 // pred_fallthru
      _
  $region6: #{conv_block_forward.3} parent=0 // loop_footer
    %s12 = sadd.s32 1, %s8
  $region7: #{conv_block_forward.3} parent=0 // loop_footer_branch
    %7 = sbr.rel target = $region3
  $region8: #{conv_block_forward.3} parent=0 // loop_exit
    _

// kernel: conv_block_forward.2
$region0: #{conv_block_forward.2}
  #allocation0 [shape = 'u32[]', space=smem, size = 0x4, offset = 0x4, fixed_abs, tag = 'smem constant byte address 0x4 - core index']
  #allocation1 [shape = 'u32[144,128]{1,0:T(1,128)}', space=vmem, size = 0x12000, scoped, tag = 'internal scratch']
  %s0 = inlined_call_operand.vmem [shape: bf16[2,2,16,160], index: 0, kind: input, shape index: {}]
  %s1 = inlined_call_operand.vmem [shape: bf16[3,8,16], index: 1, kind: input, shape index: {}]
  %s2 = inlined_call_operand.vmem [shape: f32[2,8,2], index: 2, kind: output, shape index: {0}]
  %s3 = inlined_call_operand.vmem [shape: bf16[2,8,256], index: 3, kind: output, shape index: {1}]
  %4 = xla_tuple %s2, %s3
  %s5 = sld [smem:[#allocation0]]
  $region53: #{conv_block_forward.2} parent=0
    _
  %s7 = ssub.s32 1, %s5
  %s8 = scalar_select 0, %s7, %s5
  loop: start=0, step=1, limit=6
  $region2: #{conv_block_forward.2} parent=0 // loop_pre_header
    _
  $region3: #{conv_block_forward.2} parent=0 // loop_header
    %s10 = sphi 0, %s14
    %p11 = scmp.ge.s32.totalorder %s10, 6
    %s17 = sphi 0, %s29
    %s18 = sphi 0, %s25
    %s19 = sphi 0, %s17
    %s20 = sphi 0, %s18
    %s21 = sphi 0, %s19
    %s22 = sphi 0, %s20
    %s34 = sphi 0, %s36
    %s37 = sphi 0, %s34
    %s38 = sphi 0, %s37
    %s54 = sphi 0, %s38
    %s58 = sphi 0, %s58
    %s60 = sphi 0, %s58
    %s61 = sphi 0, %s60
    %s75 = sphi 0, %s61
    %s81 = sphi 0, %s83
    %s84 = sphi 0, %s81
    %s85 = sphi 0, %s84
    %s101 = sphi 0, %s85
    %s109 = sphi 0, %s111
    %s112 = sphi 0, %s109
    %s113 = sphi 0, %s112
    %s129 = sphi 0, %s113
  $region4: #{conv_block_forward.2} parent=0 // loop_header_branch
    %13 = sbr.rel (%p11) target = $region8
  $region5: #{conv_block_forward.2} parent=0 // loop_body
    %s15 = ssub.s32 %s10, 1
    %s16 = ssub.s32 %s10, 2
    %s23 = sadd.s32 1, %s18
    %p24 = scmp.ge.s32.totalorder %s23, 2
    %s25 = scalar_select %p24, 0, %s23
    %s26 = sadd.s32 1, %s17
    %s27 = scalar_select %p24, %s26, %s17
    %p28 = scmp.ge.s32.totalorder %s27, 2
    %s29 = scalar_select %p28, 0, %s27
    %s30 = ssub.s32 %s17, %s29
    %s31 = ssub.s32 %s18, %s25
    %s32 = sor.u32 %s30, %s31
    %p33 = scmp.eq.s32.totalorder %s32, 0
    %s35 = sadd.s32 %s34, 1
    %s36 = scalar_select %p33, %s34, %s35
    %p39 = pneg %p33
    %p40 = scmp.eq.s32.totalorder %s10, 3
    %p41 = por %p39, %p40
    %p42 = scmp.ne.s32.totalorder %s34, %s37
    %p43 = scmp.eq.s32.totalorder %s10, 0
    %p44 = por %p42, %p43
    %p45 = scmp.ne.s32.totalorder %s34, %s37
    %p46 = scmp.eq.s32.totalorder %s15, 3
    %p47 = por %p45, %p46
    %p48 = scmp.ne.s32.totalorder %s37, %s38
    %p49 = scmp.eq.s32.totalorder %s15, 0
    %p50 = por %p48, %p49
    %p51 = scmp.ne.s32.totalorder %s37, %s38
    %p52 = scmp.eq.s32.totalorder %s16, 3
    %p53 = por %p51, %p52
    %p55 = scmp.ne.s32.totalorder %s38, %s54
    %p56 = scmp.eq.s32.totalorder %s16, 0
    %p57 = por %p55, %p56
    %s59 = sadd.s32 %s58, 1
    %p62 = scmp.eq.s32.totalorder %s10, 3
    %p63 = scmp.ne.s32.totalorder %s58, %s60
    %p64 = scmp.eq.s32.totalorder %s10, 0
    %p65 = por %p63, %p64
    %p66 = scmp.ne.s32.totalorder %s58, %s60
    %p67 = scmp.eq.s32.totalorder %s15, 3
    %p68 = por %p66, %p67
    %p69 = scmp.ne.s32.totalorder %s60, %s61
    %p70 = scmp.eq.s32.totalorder %s15, 0
    %p71 = por %p69, %p70
    %p72 = scmp.ne.s32.totalorder %s60, %s61
    %p73 = scmp.eq.s32.totalorder %s16, 3
    %p74 = por %p72, %p73
    %p76 = scmp.ne.s32.totalorder %s61, %s75
    %p77 = scmp.eq.s32.totalorder %s16, 0
    %p78 = por %p76, %p77
    %s79 = ssub.s32 %s17, %s29
    %p80 = scmp.eq.s32.totalorder %s79, 0
    %s82 = sadd.s32 %s81, 1
    %s83 = scalar_select %p80, %s81, %s82
    %p86 = pneg %p80
    %p87 = scmp.eq.s32.totalorder %s10, 3
    %p88 = por %p86, %p87
    %p89 = scmp.ne.s32.totalorder %s81, %s84
    %p90 = scmp.eq.s32.totalorder %s10, 0
    %p91 = por %p89, %p90
    %p92 = scmp.ne.s32.totalorder %s81, %s84
    %p93 = scmp.eq.s32.totalorder %s15, 3
    %p94 = por %p92, %p93
    %p95 = scmp.ne.s32.totalorder %s84, %s85
    %p96 = scmp.eq.s32.totalorder %s15, 0
    %p97 = por %p95, %p96
    %p98 = scmp.ne.s32.totalorder %s84, %s85
    %p99 = scmp.eq.s32.totalorder %s16, 3
    %p100 = por %p98, %p99
    %p102 = scmp.ne.s32.totalorder %s85, %s101
    %p103 = scmp.eq.s32.totalorder %s16, 0
    %p104 = por %p102, %p103
    %s105 = ssub.s32 %s17, %s29
    %s106 = ssub.s32 %s18, %s25
    %s107 = sor.u32 %s105, %s106
    %p108 = scmp.eq.s32.totalorder %s107, 0
    %s110 = sadd.s32 %s109, 1
    %s111 = scalar_select %p108, %s109, %s110
    %p114 = pneg %p108
    %p115 = scmp.eq.s32.totalorder %s10, 3
    %p116 = por %p114, %p115
    %p117 = scmp.ne.s32.totalorder %s109, %s112
    %p118 = scmp.eq.s32.totalorder %s10, 0
    %p119 = por %p117, %p118
    %p120 = scmp.ne.s32.totalorder %s109, %s112
    %p121 = scmp.eq.s32.totalorder %s15, 3
    %p122 = por %p120, %p121
    %p123 = scmp.ne.s32.totalorder %s112, %s113
    %p124 = scmp.eq.s32.totalorder %s15, 0
    %p125 = por %p123, %p124
    %p126 = scmp.ne.s32.totalorder %s112, %s113
    %p127 = scmp.eq.s32.totalorder %s16, 3
    %p128 = por %p126, %p127
    %p130 = scmp.ne.s32.totalorder %s113, %s129
    %p131 = scmp.eq.s32.totalorder %s16, 0
    %p132 = por %p130, %p131
    %p133 = scmp.le.s32.totalorder 1, %s10
    %p134 = scmp.lt.s32.totalorder %s10, 5
    %p135 = pnand %p133, %p134
    %p136 = pneg %p135
    // Predicated region
    $region9: #{conv_block_forward.2} parent=5 // pred_check
      _
    $region10: #{conv_block_forward.2} parent=5 // pred_check_branch
      %138 = sbr.rel (%p135) target = $region12
    $region11: #{conv_block_forward.2} parent=5 // pred_region
      %s139 = ssub.s32 %s10, 1
      // Predicated region
      $region13: #{conv_block_forward.2} parent=11 // pred_check
        %p140 = pneg %p71
      $region14: #{conv_block_forward.2} parent=11 // pred_check_branch
        %142 = sbr.rel (%p140) target = $region16
      $region15: #{conv_block_forward.2} parent=11 // pred_region
        _
      $region16: #{conv_block_forward.2} parent=11 // pred_fallthru
        _
    $region12: #{conv_block_forward.2} parent=5 // pred_fallthru
      _
    %p143 = scmp.lt.s32.totalorder %s10, 4
    // Predicated region
    $region17: #{conv_block_forward.2} parent=5 // pred_check
      %p144 = pneg %p143
    $region18: #{conv_block_forward.2} parent=5 // pred_check_branch
      %146 = sbr.rel (%p144) target = $region20
    $region19: #{conv_block_forward.2} parent=5 // pred_region
      // Predicated region
      $region21: #{conv_block_forward.2} parent=19 // pred_check
        %p147 = pneg %p44
      $region22: #{conv_block_forward.2} parent=19 // pred_check_branch
        %149 = sbr.rel (%p147) target = $region24
      $region23: #{conv_block_forward.2} parent=19 // pred_region
        %p150 = scmp.lt.s32.totalorder %s17, 1
        %s151 = scalar_select %p150, %s17, 1
        %p152 = scmp.lt.s32.totalorder %s18, 1
        %s153 = scalar_select %p152, %s18, 1
        %s154 = smul.addr %s153, 4
        %s155 = smul.addr %s151, 8
        %s156 = sadd.s32 %s154, %s155
        %s157 = smul.addr %s156, 4
        %s158 = scalar_lea.vmem %s0, %s157
      $region24: #{conv_block_forward.2} parent=19 // pred_fallthru
        _
    $region20: #{conv_block_forward.2} parent=5 // pred_fallthru
      _
    %p159 = scmp.le.s32.totalorder 1, %s10
    %p160 = scmp.lt.s32.totalorder %s10, 5
    %p161 = pnand %p159, %p160
    %p162 = pneg %p161
    // Predicated region
    $region25: #{conv_block_forward.2} parent=5 // pred_check
      _
    $region26: #{conv_block_forward.2} parent=5 // pred_check_branch
      %164 = sbr.rel (%p161) target = $region28
    $region27: #{conv_block_forward.2} parent=5 // pred_region
      %s165 = ssub.s32 %s10, 1
      %p166 = scmp.lt.s32.totalorder %s19, 1
      %s167 = scalar_select %p166, %s19, 1
      %p168 = scmp.lt.s32.totalorder %s20, 1
      %s169 = scalar_select %p168, %s20, 1
      %s170 = smul.addr %s169, 4
      %s171 = smul.addr %s167, 8
      %s172 = sadd.s32 %s170, %s171
      %s173 = smul.addr %s172, 4
      %s174 = scalar_lea.vmem %s0, %s173
      %p175 = pneg %p50
      %p176 = pneg %p47
      %p177 = pneg %p71
      %p178 = pneg %p68
      %p179 = pneg %p97
      %p180 = pneg %p94
      %p181 = scmp.lt.s32.totalorder %s19, 1
      %s182 = scalar_select %p181, %s19, 1
      %s183 = smul.addr %s182, 8
      %s184 = scalar_lea.vmem %s2, %s183
      %p185 = pneg %p125
      %p186 = pneg %p122
      %p187 = scmp.lt.s32.totalorder %s19, 1
      %s188 = scalar_select %p187, %s19, 1
      %p189 = scmp.lt.s32.totalorder %s20, 1
      %s190 = scalar_select %p189, %s20, 1
      %s191 = smul.addr %s188, 2
      %s192 = sadd.s32 %s190, %s191
      %s193 = smul.addr %s192, 4
      %s194 = scalar_lea.vmem %s3, %s193
      %p195 = scmp.lt.s32.totalorder %s19, 1
      %s196 = scalar_select %p195, %s19, 1
      %p197 = scmp.lt.s32.totalorder %s20, 1
      %s198 = scalar_select %p197, %s20, 1
      %s199 = smul.addr %s198, 4
      %s200 = smul.addr %s196, 8
      %s201 = sadd.s32 %s199, %s200
      %s202 = smul.addr %s201, 4
      %s203 = scalar_lea.vmem %s0, %s202
      %p204 = scmp.lt.s32.totalorder %s19, 1
      %s205 = scalar_select %p204, %s19, 1
      %s206 = smul.addr %s205, 8
      %s207 = scalar_lea.vmem %s2, %s206
      %p208 = scmp.lt.s32.totalorder %s19, 1
      %s209 = scalar_select %p208, %s19, 1
      %p210 = scmp.lt.s32.totalorder %s20, 1
      %s211 = scalar_select %p210, %s20, 1
      %s212 = smul.addr %s209, 2
      %s213 = sadd.s32 %s211, %s212
      %s214 = smul.addr %s213, 4
      %s215 = scalar_lea.vmem %s3, %s214
      %v217 = vld [vmem:[%s203] sm:$0xf]
      %v218 = vld [vmem:[%s203 + $0x8] sm:$0xf]
      %v219 = vld [vmem:[%s1] sm:$0xf]
      %v220 = vld [vmem:[%s203] sm:$0xff]
      %v221 = vld [vmem:[%s203 + $0x8] sm:$0xff]
      %s222 = scalar_lea.vmem %s1, 4
      %v223 = vld [vmem:[%s222] sm:$0xf]
      %v226 = vunpack.c.l.b16 %v220
      %v227 = vunpack.c.h.b16 %v220
      %v228 = vunpack.c.l.b16 %v221
      %v229 = vunpack.c.h.b16 %v221
      %v230 = vpack.c.b16 %v228, %v226
      %v231 = vpack.c.b16 %v229, %v227
      %232 = vrot.lane.b32.xlu0 %v230, 112
      %v233 = vpop.permute.xlu0 %232
      %234 = vrot.lane.b32.xlu0 %v231, 112
      %v235 = vpop.permute.xlu0 %234
      %vm236 = vcmask 916480
      %v237 = vsel %vm236, %v233, %v235
      %vm239 = vcmask 130048
      %v241 = vsel %vm239, %v223, 0
      %243 = vmatprep.subr.bf16.mxu0 0
      %244 = vmatpush1.bf16.msra.mxu0 %v237
      %245 = vmatprep.subr.bf16.mxu0 0
      %246 = vmatpush1.bf16.msra.mxu0 0
      %247 = vmatprep.subr.bf16.mxu0 0
      %248 = vmatpush1.bf16.msra.mxu0 0
      %249 = vmatprep.subr.bf16.mxu0 0
      %250 = vmatpush1.bf16.msra.mxu0 0
      %251 = vmatprep.subr.bf16.mxu0 0
      %252 = vmatpush1.bf16.msra.mxu0 0
      %253 = vmatprep.subr.bf16.mxu0 0
      %254 = vmatpush1.bf16.msra.mxu0 0
      %255 = vmatprep.subr.bf16.mxu0 0
      %256 = vmatpush1.bf16.msra.mxu0 0
      %257 = vmatprep.subr.bf16.mxu0 0
      %258 = vmatpush1.bf16.msra.mxu0 0
      %259 = vmatprep.subr.bf16.mxu0 0
      %260 = vmatpush1.bf16.msra.mxu0 0
      %261 = vmatprep.subr.bf16.mxu0 0
      %262 = vmatpush1.bf16.msra.mxu0 0
      %263 = vmatprep.subr.bf16.mxu0 0
      %264 = vmatpush1.bf16.msra.mxu0 0
      %265 = vmatprep.subr.bf16.mxu0 0
      %266 = vmatpush1.bf16.msra.mxu0 0
      %267 = vmatprep.subr.bf16.mxu0 0
      %268 = vmatpush1.bf16.msra.mxu0 0
      %269 = vmatprep.subr.bf16.mxu0 0
      %270 = vmatpush1.bf16.msra.mxu0 0
      %271 = vmatprep.subr.bf16.mxu0 0
      %272 = vmatpush1.bf16.msra.mxu0 0
      %273 = vmatprep.subr.bf16.mxu0 0
      %274 = vmatpush1.bf16.msra.mxu0 0
      %275 = vmatprep.mubr.bf16.mxu0 0
      %276 = vmatmul.mubr.bf16.gmra.mrb[0].mxu0 %v241
      %v277 = vpop.f32.mrb[0].mxu0
      %v278 = vadd.f32 0.0, %v277
      %v279 = vpop.f32.mrb[0].mxu0
      %v280 = vpop.f32.mrb[0].mxu0
      %v281 = vpop.f32.mrb[0].mxu0
      %282 = vdwg.mxu0
      %v285 = vunpack.c.l.b16 %v217
      %v286 = vunpack.c.l.b16 %v218
      %v287 = vpack.c.b16 %v286, %v285
      %v290 = vsel %vm239, %v219, 0
      %292 = vmatprep.subr.bf16.mxu0 0
      %293 = vmatpush1.bf16.msra.mxu0 %v287
      %294 = vmatprep.subr.bf16.mxu0 0
      %295 = vmatpush1.bf16.msra.mxu0 0
      %296 = vmatprep.subr.bf16.mxu0 0
      %297 = vmatpush1.bf16.msra.mxu0 0
      %298 = vmatprep.subr.bf16.mxu0 0
      %299 = vmatpush1.bf16.msra.mxu0 0
      %300 = vmatprep.subr.bf16.mxu0 0
      %301 = vmatpush1.bf16.msra.mxu0 0
      %302 = vmatprep.subr.bf16.mxu0 0
      %303 = vmatpush1.bf16.msra.mxu0 0
      %304 = vmatprep.subr.bf16.mxu0 0
      %305 = vmatpush1.bf16.msra.mxu0 0
      %306 = vmatprep.subr.bf16.mxu0 0
      %307 = vmatpush1.bf16.msra.mxu0 0
      %308 = vmatprep.subr.bf16.mxu0 0
      %309 = vmatpush1.bf16.msra.mxu0 0
      %310 = vmatprep.subr.bf16.mxu0 0
      %311 = vmatpush1.bf16.msra.mxu0 0
      %312 = vmatprep.subr.bf16.mxu0 0
      %313 = vmatpush1.bf16.msra.mxu0 0
      %314 = vmatprep.subr.bf16.mxu0 0
      %315 = vmatpush1.bf16.msra.mxu0 0
      %316 = vmatprep.subr.bf16.mxu0 0
      %317 = vmatpush1.bf16.msra.mxu0 0
      %318 = vmatprep.subr.bf16.mxu0 0
      %319 = vmatpush1.bf16.msra.mxu0 0
      %320 = vmatprep.subr.bf16.mxu0 0
      %321 = vmatpush1.bf16.msra.mxu0 0
      %322 = vmatprep.subr.bf16.mxu0 0
      %323 = vmatpush1.bf16.msra.mxu0 0
      %324 = vmatprep.mubr.bf16.mxu0 0
      %325 = vmatmul.mubr.bf16.gmra.mrb[0].mxu0 %v290
      %v326 = vpop.f32.mrb[0].mxu0
      %v327 = vadd.f32 %v278, %v326
      %v328 = vpop.f32.mrb[0].mxu0
      %v329 = vpop.f32.mrb[0].mxu0
      %v330 = vpop.f32.mrb[0].mxu0
      %331 = vdwg.mxu0
      %s332 = scalar_lea.vmem %s1, 8
      %v333 = vld [vmem:[%s332] sm:$0xf]
      %334 = vrot.lane.b32.xlu0 %v230, 96
      %v335 = vpop.permute.xlu0 %334
      %336 = vrot.lane.b32.xlu0 %v231, 96
      %v337 = vpop.permute.xlu0 %336
      %vm338 = vcmask 785408
      %v339 = vsel %vm338, %v335, %v337
      %v342 = vsel %vm239, %v333, 0
      %344 = vmatprep.subr.bf16.mxu0 0
      %345 = vmatpush1.bf16.msra.mxu0 %v339
      %346 = vmatprep.subr.bf16.mxu0 0
      %347 = vmatpush1.bf16.msra.mxu0 0
      %348 = vmatprep.subr.bf16.mxu0 0
      %349 = vmatpush1.bf16.msra.mxu0 0
      %350 = vmatprep.subr.bf16.mxu0 0
      %351 = vmatpush1.bf16.msra.mxu0 0
      %352 = vmatprep.subr.bf16.mxu0 0
      %353 = vmatpush1.bf16.msra.mxu0 0
      %354 = vmatprep.subr.bf16.mxu0 0
      %355 = vmatpush1.bf16.msra.mxu0 0
      %356 = vmatprep.subr.bf16.mxu0 0
      %357 = vmatpush1.bf16.msra.mxu0 0
      %358 = vmatprep.subr.bf16.mxu0 0
      %359 = vmatpush1.bf16.msra.mxu0 0
      %360 = vmatprep.subr.bf16.mxu0 0
      %361 = vmatpush1.bf16.msra.mxu0 0
      %362 = vmatprep.subr.bf16.mxu0 0
      %363 = vmatpush1.bf16.msra.mxu0 0
      %364 = vmatprep.subr.bf16.mxu0 0
      %365 = vmatpush1.bf16.msra.mxu0 0
      %366 = vmatprep.subr.bf16.mxu0 0
      %367 = vmatpush1.bf16.msra.mxu0 0
      %368 = vmatprep.subr.bf16.mxu0 0
      %369 = vmatpush1.bf16.msra.mxu0 0
      %370 = vmatprep.subr.bf16.mxu0 0
      %371 = vmatpush1.bf16.msra.mxu0 0
      %372 = vmatprep.subr.bf16.mxu0 0
      %373 = vmatpush1.bf16.msra.mxu0 0
      %374 = vmatprep.subr.bf16.mxu0 0
      %375 = vmatpush1.bf16.msra.mxu0 0
      %376 = vmatprep.mubr.bf16.mxu0 0
      %377 = vmatmul.mubr.bf16.gmra.mrb[0].mxu0 %v342
      %v378 = vpop.f32.mrb[0].mxu0
      %v379 = vadd.f32 0.0, %v378
      %v380 = vpop.f32.mrb[0].mxu0
      %v381 = vpop.f32.mrb[0].mxu0
      %v382 = vpop.f32.mrb[0].mxu0
      %383 = vdwg.mxu0
      %v384 = vadd.f32 %v327, %v379
      %p385 = scmp.eq.s32.totalorder %s20, 0
      // Predicated region
      $region29: #{conv_block_forward.2} parent=27 // pred_check
        %p386 = pneg %p385
      $region30: #{conv_block_forward.2} parent=27 // pred_check_branch
        %388 = sbr.rel (%p386) target = $region32
      $region31: #{conv_block_forward.2} parent=27 // pred_region
        %vm389 = vcmask 15360
        %390 = vst.msk [vmem:[%s207] sm:$0xff] %vm389, 0.0
      $region32: #{conv_block_forward.2} parent=27 // pred_fallthru
        _
      %391 = vadd.xlane.f32.xlu0 %v384
      %v392 = vpop.xlane.xlu0 %391
      %v393 = vmul.f32 %v384, %v384
      %394 = vadd.xlane.f32.xlu0 %v393
      %v395 = vpop.xlane.xlu0 %394
      %v396 = vld [vmem:[%s207] sm:$0xff]
      %vm397 = vcmask 7168
      %v398 = vsel %vm397, %v392, %v395
      %v399 = vadd.f32 %v396, %v398
      %vm400 = vcmask 15360
      %401 = vst.msk [vmem:[%s207] sm:$0xff] %vm400, %v399
      %v402 = vpack.c.bf16 %v384, %v384
      %403 = vst [vmem:[%s215] sm:$0xf] %v402
      %p404 = scmp.lt.s32.totalorder %s19, 1
      %s405 = scalar_select %p404, %s19, 1
      %s406 = smul.addr %s405, 8
      %s407 = scalar_lea.vmem %s2, %s406
      %p408 = scmp.lt.s32.totalorder %s19, 1
      %s409 = scalar_select %p408, %s19, 1
      %p410 = scmp.lt.s32.totalorder %s20, 1
      %s411 = scalar_select %p410, %s20, 1
      %s412 = smul.addr %s409, 2
      %s413 = sadd.s32 %s411, %s412
      %s414 = smul.addr %s413, 4
      %s415 = scalar_lea.vmem %s3, %s414
      // Predicated region
      $region33: #{conv_block_forward.2} parent=27 // pred_check
        %p416 = pneg %p94
      $region34: #{conv_block_forward.2} parent=27 // pred_check_branch
        %418 = sbr.rel (%p416) target = $region36
      $region35: #{conv_block_forward.2} parent=27 // pred_region
        _
      $region36: #{conv_block_forward.2} parent=27 // pred_fallthru
        _
      // Predicated region
      $region37: #{conv_block_forward.2} parent=27 // pred_check
        %p419 = pneg %p122
      $region38: #{conv_block_forward.2} parent=27 // pred_check_branch
        %421 = sbr.rel (%p419) target = $region40
      $region39: #{conv_block_forward.2} parent=27 // pred_region
        _
      $region40: #{conv_block_forward.2} parent=27 // pred_fallthru
        _
    $region28: #{conv_block_forward.2} parent=5 // pred_fallthru
      _
    %p422 = scmp.le.s32.totalorder 2, %s10
    // Predicated region
    $region41: #{conv_block_forward.2} parent=5 // pred_check
      %p423 = pneg %p422
    $region42: #{conv_block_forward.2} parent=5 // pred_check_branch
      %425 = sbr.rel (%p423) target = $region44
    $region43: #{conv_block_forward.2} parent=5 // pred_region
      %s426 = ssub.s32 %s10, 2
      // Predicated region
      $region45: #{conv_block_forward.2} parent=43 // pred_check
        %p427 = pneg %p100
      $region46: #{conv_block_forward.2} parent=43 // pred_check_branch
        %429 = sbr.rel (%p427) target = $region48
      $region47: #{conv_block_forward.2} parent=43 // pred_region
        %p430 = scmp.lt.s32.totalorder %s21, 1
        %s431 = scalar_select %p430, %s21, 1
        %s432 = smul.addr %s431, 8
        %s433 = scalar_lea.vmem %s2, %s432
      $region48: #{conv_block_forward.2} parent=43 // pred_fallthru
        _
      // Predicated region
      $region49: #{conv_block_forward.2} parent=43 // pred_check
        %p434 = pneg %p128
      $region50: #{conv_block_forward.2} parent=43 // pred_check_branch
        %436 = sbr.rel (%p434) target = $region52
      $region51: #{conv_block_forward.2} parent=43 // pred_region
        %p437 = scmp.lt.s32.totalorder %s21, 1
        %s438 = scalar_select %p437, %s21, 1
        %p439 = scmp.lt.s32.totalorder %s22, 1
        %s440 = scalar_select %p439, %s22, 1
        %s441 = smul.addr %s438, 2
        %s442 = sadd.s32 %s440, %s441
        %s443 = smul.addr %s442, 4
        %s444 = scalar_lea.vmem %s3, %s443
      $region52: #{conv_block_forward.2} parent=43 // pred_fallthru
        _
    $region44: #{conv_block_forward.2} parent=5 // pred_fallthru
      _
  $region6: #{conv_block_forward.2} parent=0 // loop_footer
    %s14 = sadd.s32 1, %s10
  $region7: #{conv_block_forward.2} parent=0 // loop_footer_branch
    %9 = sbr.rel target = $region3
  $region8: #{conv_block_forward.2} parent=0 // loop_exit
    _

</llo_original>
